<compile_context>
chip_gen: v7x
topology: tpu7x:2x2x1
jax: 0.10.0
libtpu: 0.0.40
codegen_flags: <defaults>
</compile_context>

<pallas_src>
import functools

import jax
import jax.numpy as jnp
from jax.experimental import pallas as pl
from jax.experimental.pallas import tpu as pltpu


# ----------------------------- gate math (f32) ----------------------------- #

def _shift_channels(v, d):
    """Zero-padded +/-d shifts of v along the channel (sublane) axis.

    v: (..., C, 1).  Returns (v_prev, v_next) with
      v_prev[..., i, :] = v[..., i-d, :]   (0 for i < d)
      v_next[..., i, :] = v[..., i+d, :]   (0 for i >= C-d)
    """
    c = v.shape[-2]
    if d >= c:
        z = jnp.zeros_like(v)
        return z, z
    zeros = jnp.zeros_like(v[..., :d, :])
    v_prev = jnp.concatenate([zeros, v[..., : c - d, :]], axis=-2)
    v_next = jnp.concatenate([v[..., d:, :], zeros], axis=-2)
    return v_prev, v_next


def _conv3(v, w_ref, d):
    """3-tap zero-padded channel conv: y[i] = w0*v[i-d] + w1*v[i] + w2*v[i+d]."""
    v_prev, v_next = _shift_channels(v, d)
    return w_ref[0] * v_prev + w_ref[1] * v + w_ref[2] * v_next


def _gate_from_sums(sums, w1_ref, w2_ref, inv_hw):
    """sums: (..., C, 1) f32 spatial sums -> (..., C, 1) f32 sigmoid gate."""
    avg = sums * inv_hw
    z = _conv3(avg, w1_ref, 1)          # Conv1d k=3, pad=1
    z = z * jax.nn.sigmoid(z)           # SiLU
    u = _conv3(z, w2_ref, 2)            # Conv1d k=3, pad=2, dilation=2
    return jax.nn.sigmoid(u)


def _spatial_sums(x):
    """x: (..., C, HW) -> (..., C, 1) f32 sums over the lane (HW) axis."""
    if x.dtype == jnp.float32:
        # Exact f32 cross-lane reduction (XLU); no extra copies needed.
        return jnp.sum(x, axis=-1, keepdims=True)
    # Sub-f32 (e.g. bf16) inputs: reduce on the MXU with f32 accumulation so
    # we never materialize an f32 copy of the whole (C, HW) slab.
    hw = x.shape[-1]
    ones = jnp.ones((hw, 1), dtype=x.dtype)
    if x.ndim == 2:
        return jnp.dot(x, ones, preferred_element_type=jnp.float32)
    lead = x.shape[:-2]
    flat = x.reshape((-1, hw))
    s = jnp.dot(flat, ones, preferred_element_type=jnp.float32)
    return s.reshape(lead + (x.shape[-2], 1))


# ----------------------------- kernel bodies ------------------------------ #

def _fused_kernel(w1_ref, w2_ref, x_ref, o_ref, *, inv_hw):
    # One (bb, C, HW) slab per grid step: pool, gate, scale — x is read once
    # and written once; HW sits on lanes so loads/stores are lane-dense.
    x = x_ref[...]
    gate = _gate_from_sums(_spatial_sums(x), w1_ref, w2_ref, inv_hw)  # (bb,C,1) f32
    o_ref[...] = x * gate.astype(x.dtype)


def _reduce_gate_kernel(w1_ref, w2_ref, x_ref, g_ref, *, inv_hw, hw_total, hw_tile):
    # grid = (B, n_hw): accumulate per-channel sums over HW tiles into the
    # VMEM-resident (C, 1) output block, finalize the gate on the last tile.
    t = pl.program_id(1)

    @pl.when(t == 0)
    def _init():
        g_ref[...] = jnp.zeros_like(g_ref)

    x = x_ref[...]                                           # (C, hw_tile)
    # Mask the ragged tail (the last block may extend past HW).
    valid = jnp.minimum(hw_total - t * hw_tile, hw_tile)
    lane = jax.lax.broadcasted_iota(jnp.int32, x.shape, x.ndim - 1)
    x = jnp.where(lane < valid, x, jnp.zeros_like(x))
    g_ref[...] += _spatial_sums(x)

    @pl.when(t == pl.num_programs(1) - 1)
    def _finalize():
        g_ref[...] = _gate_from_sums(g_ref[...], w1_ref, w2_ref, inv_hw)


def _apply_gate_kernel(g_ref, x_ref, o_ref):
    # Pure streaming gate: (C, hw_t) tile times the per-batch (C, 1) gate.
    # Ragged-tail lanes read garbage and their writes are dropped by Pallas.
    x = x_ref[...]
    o_ref[...] = x * g_ref[...].astype(x.dtype)


# ------------------------------ host helpers ------------------------------ #

def _vmem_capacity_bytes():
    try:
        return int(pltpu.get_tpu_info().vmem_capacity_bytes)
    except Exception:
        return 64 * 1024 * 1024          # conservative default (v7x per-TC VMEM)


def _round_up(x, m):
    return -(-x // m) * m


def _pick_hw_tile(hw, c, itemsize, budget_bytes):
    """Lane-dense tile: a multiple of 128 close to the per-block byte budget."""
    lanes = budget_bytes // max(1, c * itemsize)
    lanes = max(128, (lanes // 128) * 128)
    return int(min(lanes, _round_up(hw, 128)))


def _pick_batch_fold(b, slab_bytes, budget_bytes):
    """Largest bb dividing B with bb * slab <= budget.  Keep >= 2 grid steps
    when B >= 2 so the (parallel) batch axis can still shard across cores."""
    cap = b if b <= 1 else max(1, b // 2)
    best = 1
    for bb in range(1, cap + 1):
        if b % bb == 0 and bb * slab_bytes <= budget_bytes:
            best = bb
    return best


def deca_layer_forward(x_nchw, w1, w2, *, slab_budget_bytes=None):
    """x_nchw: (B, C, H, W). w1, w2: (3,) conv taps. Returns x * channel_gate."""
    B, C, H, W = x_nchw.shape
    HW = H * W
    x3 = x_nchw.reshape(B, C, HW)            # free reshape, no transpose
    w1 = jnp.asarray(w1, jnp.float32)
    w2 = jnp.asarray(w2, jnp.float32)
    inv_hw = 1.0 / HW

    itemsize = jnp.dtype(x_nchw.dtype).itemsize
    slab_bytes = C * HW * itemsize

    # Per-generation VMEM budget: raise the scoped limit (defaults are only
    # 16/32 MiB) and size blocks assuming ~4x buffering (double-buffered
    # streamed input + output) plus headroom for Pallas internals.
    vmem_cap = _vmem_capacity_bytes()                     # 128 MiB v5e/v6e, 64 MiB v7x
    vmem_limit = int(min((vmem_cap * 3) // 4, 100 * 1024 * 1024))
    if slab_budget_bytes is None:
        slab_budget_bytes = vmem_limit // 5               # ~19 MiB v5e/v6e, ~9.6 MiB v7x

    def cparams(sem):
        return pltpu.CompilerParams(dimension_semantics=sem,
                                    vmem_limit_bytes=vmem_limit)

    w_spec = pl.BlockSpec(memory_space=pltpu.MemorySpace.SMEM)   # 3 taps as scalars

    if slab_bytes <= slab_budget_bytes:
        # ---- Path A: fused single pass (read x once, write once), batch-folded.
        bb = _pick_batch_fold(B, slab_bytes, slab_budget_bytes)
        out3 = pl.pallas_call(
            functools.partial(_fused_kernel, inv_hw=inv_hw),
            out_shape=jax.ShapeDtypeStruct((B, C, HW), x_nchw.dtype),
            grid=(B // bb,),
            in_specs=[
                w_spec, w_spec,
                pl.BlockSpec((bb, C, HW), lambda i: (i, 0, 0)),
            ],
            out_specs=pl.BlockSpec((bb, C, HW), lambda i: (i, 0, 0)),
            compiler_params=cparams(("parallel",)),
        )(w1, w2, x3)
    else:
        # ---- Path B: two-pass (tiled reduce + gate, then streaming gate). ----
        hw_t = _pick_hw_tile(HW, C, itemsize, slab_budget_bytes)
        n_hw = pl.cdiv(HW, hw_t)

        gate = pl.pallas_call(
            functools.partial(_reduce_gate_kernel, inv_hw=inv_hw,
                              hw_total=HW, hw_tile=hw_t),
            out_shape=jax.ShapeDtypeStruct((B, C, 1), jnp.float32),
            grid=(B, n_hw),
            in_specs=[
                w_spec, w_spec,
                pl.BlockSpec((None, C, hw_t), lambda b, t: (b, 0, t)),
            ],
            out_specs=pl.BlockSpec((None, C, 1), lambda b, t: (b, 0, 0)),
            compiler_params=cparams(("parallel", "arbitrary")),
        )(w1, w2, x3)

        out3 = pl.pallas_call(
            _apply_gate_kernel,
            out_shape=jax.ShapeDtypeStruct((B, C, HW), x_nchw.dtype),
            grid=(B, n_hw),
            in_specs=[
                pl.BlockSpec((None, C, 1), lambda b, t: (b, 0, 0)),
                pl.BlockSpec((None, C, hw_t), lambda b, t: (b, 0, t)),
            ],
            out_specs=pl.BlockSpec((None, C, hw_t), lambda b, t: (b, 0, t)),
            compiler_params=cparams(("parallel", "parallel")),
        )(gate, x3)

    return out3.reshape(B, C, H, W)


# ------------------------------- reference -------------------------------- #

def _reference(x, w1, w2):
    # Pure-JAX reference mirroring the PyTorch deca_layer forward.
    avg = jnp.mean(x, axis=(2, 3))                        # (B, C)
    p1 = jnp.pad(avg, ((0, 0), (1, 1)))
    z = w1[0] * p1[:, :-2] + w1[1] * p1[:, 1:-1] + w1[2] * p1[:, 2:]
    z = z * jax.nn.sigmoid(z)                             # SiLU
    p2 = jnp.pad(z, ((0, 0), (2, 2)))
    u = w2[0] * p2[:, :-4] + w2[1] * p2[:, 2:-2] + w2[2] * p2[:, 4:]
    s = jax.nn.sigmoid(u)
    return x * s[:, :, None, None]


if __name__ == "__main__":
    key = jax.random.PRNGKey(0)
    kx, k1, k2 = jax.random.split(key, 3)

    B, C, H, W = 2, 32, 16, 16
    x = jax.random.normal(kx, (B, C, H, W), dtype=jnp.float32)

    # Deterministic Conv1d(1,1,3) weights (kaiming-uniform bound = 1/sqrt(3)).
    bound = 1.0 / (3.0 ** 0.5)
    w1 = jax.random.uniform(k1, (3,), minval=-bound, maxval=bound, dtype=jnp.float32)
    w2 = jax.random.uniform(k2, (3,), minval=-bound, maxval=bound, dtype=jnp.float32)

    ref = _reference(x, w1, w2)

    # Path A: fused, batch-folded single pass (gate math is exact f32 now).
    out_fused = jax.block_until_ready(deca_layer_forward(x, w1, w2))
    assert out_fused.shape == x.shape and out_fused.dtype == x.dtype
    assert jnp.allclose(out_fused, ref, atol=1e-3, rtol=1e-3), "fused path mismatch"

    # Path B: force the tiled two-pass path (reduce+gate, then streaming gate).
    out_tiled = jax.block_until_ready(
        deca_layer_forward(x, w1, w2, slab_budget_bytes=16 * 1024))
    assert out_tiled.shape == x.shape and out_tiled.dtype == x.dtype
    assert jnp.allclose(out_tiled, ref, atol=1e-3, rtol=1e-3), "tiled path mismatch"

    # Path B with a ragged HW tail (HW=225, tile=128 -> masked tail lanes).
    x_odd = jax.random.normal(kx, (2, 16, 15, 15), dtype=jnp.float32)
    ref_odd = _reference(x_odd, w1, w2)
    out_odd = jax.block_until_ready(
        deca_layer_forward(x_odd, w1, w2, slab_budget_bytes=8 * 1024))
    assert jnp.allclose(out_odd, ref_odd, atol=1e-3, rtol=1e-3), "ragged path mismatch"

    # bf16 activations exercise the MXU pooling path (gate math stays f32; the
    # gate is applied in bf16, hence the looser tolerance).
    xb = x.astype(jnp.bfloat16)
    out_bf16 = jax.block_until_ready(deca_layer_forward(xb, w1, w2))
    assert out_bf16.shape == x.shape and out_bf16.dtype == jnp.bfloat16
    ref_bf16 = _reference(xb.astype(jnp.float32), w1, w2)
    assert jnp.allclose(out_bf16.astype(jnp.float32), ref_bf16,
                        atol=5e-2, rtol=5e-2), "bf16 path mismatch"

    print("KERNEL_OK")
</pallas_src>

<mosaic_0001>
module attributes {stable_mosaic.version = 11 : i64} {
  func.func @_fused_kernel(%arg0: i32, %arg1: memref<3xf32, #tpu.memory_space<smem>>, %arg2: memref<3xf32, #tpu.memory_space<smem>>, %arg3: memref<1x32x256xf32, #tpu.memory_space<vmem>>, %arg4: memref<1x32x256xf32, #tpu.memory_space<vmem>>) attributes {dimension_semantics = [#tpu.dimension_semantics<parallel>], iteration_bounds = array<i64: 2>, scalar_prefetch = 0 : i64, scratch_operands = 0 : i64, tpu.core_type = #tpu.core_type<tc>, window_params = [{transform_indices = @transform_0, window_bounds = array<i64: 3>}, {transform_indices = @transform_1, window_bounds = array<i64: 3>}, {transform_indices = @transform_2, window_bounds = array<i64: 1, 32, 256>}, {transform_indices = @transform_3, window_bounds = array<i64: 1, 32, 256>}]} {
    %c0 = arith.constant 0 : index
    %c0_0 = arith.constant 0 : index
    %c0_1 = arith.constant 0 : index
    %0 = vector.load %arg3[%c0, %c0_0, %c0_1] : memref<1x32x256xf32, #tpu.memory_space<vmem>>, vector<1x32x256xf32>
    %cst = arith.constant dense<0.000000e+00> : vector<1x32xf32>
    %1 = vector.multi_reduction <add>, %0, %cst [2] : vector<1x32x256xf32> to vector<1x32xf32>
    %2 = vector.shape_cast %1 : vector<1x32xf32> to vector<1x32x1xf32>
    %cst_2 = arith.constant 3.906250e-03 : f32
    %3 = vector.broadcast %cst_2 : f32 to vector<1x32x1xf32>
    %4 = arith.mulf %2, %3 : vector<1x32x1xf32>
    %cst_3 = arith.constant 0.000000e+00 : f32
    %5 = vector.broadcast %cst_3 : f32 to vector<1x1x1xf32>
    %6 = vector.extract_strided_slice %4 {offsets = [0, 0, 0], sizes = [1, 31, 1], strides = [1, 1, 1]} : vector<1x32x1xf32> to vector<1x31x1xf32>
    %7 = tpu.concatenate %5, %6 in 1 : vector<1x1x1xf32>, vector<1x31x1xf32> -> vector<1x32x1xf32>
    %8 = vector.extract_strided_slice %4 {offsets = [0, 1, 0], sizes = [1, 31, 1], strides = [1, 1, 1]} : vector<1x32x1xf32> to vector<1x31x1xf32>
    %9 = tpu.concatenate %8, %5 in 1 : vector<1x31x1xf32>, vector<1x1x1xf32> -> vector<1x32x1xf32>
    %c0_4 = arith.constant 0 : index
    %10 = memref.load %arg1[%c0_4] : memref<3xf32, #tpu.memory_space<smem>>
    %11 = vector.broadcast %10 : f32 to vector<1x32x1xf32>
    %12 = arith.mulf %11, %7 : vector<1x32x1xf32>
    %c1 = arith.constant 1 : index
    %13 = memref.load %arg1[%c1] : memref<3xf32, #tpu.memory_space<smem>>
    %14 = vector.broadcast %13 : f32 to vector<1x32x1xf32>
    %15 = arith.mulf %14, %4 : vector<1x32x1xf32>
    %16 = arith.addf %12, %15 : vector<1x32x1xf32>
    %c2 = arith.constant 2 : index
    %17 = memref.load %arg1[%c2] : memref<3xf32, #tpu.memory_space<smem>>
    %18 = vector.broadcast %17 : f32 to vector<1x32x1xf32>
    %19 = arith.mulf %18, %9 : vector<1x32x1xf32>
    %20 = arith.addf %16, %19 : vector<1x32x1xf32>
    %21 = arith.negf %20 : vector<1x32x1xf32>
    %22 = math.exp %21 : vector<1x32x1xf32>
    %cst_5 = arith.constant 1.000000e+00 : f32
    %23 = vector.broadcast %cst_5 : f32 to vector<1x32x1xf32>
    %24 = arith.addf %23, %22 : vector<1x32x1xf32>
    %25 = arith.divf %23, %24 : vector<1x32x1xf32>
    %26 = arith.mulf %20, %25 : vector<1x32x1xf32>
    %cst_6 = arith.constant 0.000000e+00 : f32
    %27 = vector.broadcast %cst_6 : f32 to vector<1x2x1xf32>
    %28 = vector.extract_strided_slice %26 {offsets = [0, 0, 0], sizes = [1, 30, 1], strides = [1, 1, 1]} : vector<1x32x1xf32> to vector<1x30x1xf32>
    %29 = tpu.concatenate %27, %28 in 1 : vector<1x2x1xf32>, vector<1x30x1xf32> -> vector<1x32x1xf32>
    %30 = vector.extract_strided_slice %26 {offsets = [0, 2, 0], sizes = [1, 30, 1], strides = [1, 1, 1]} : vector<1x32x1xf32> to vector<1x30x1xf32>
    %31 = tpu.concatenate %30, %27 in 1 : vector<1x30x1xf32>, vector<1x2x1xf32> -> vector<1x32x1xf32>
    %c0_7 = arith.constant 0 : index
    %32 = memref.load %arg2[%c0_7] : memref<3xf32, #tpu.memory_space<smem>>
    %33 = vector.broadcast %32 : f32 to vector<1x32x1xf32>
    %34 = arith.mulf %33, %29 : vector<1x32x1xf32>
    %c1_8 = arith.constant 1 : index
    %35 = memref.load %arg2[%c1_8] : memref<3xf32, #tpu.memory_space<smem>>
    %36 = vector.broadcast %35 : f32 to vector<1x32x1xf32>
    %37 = arith.mulf %36, %26 : vector<1x32x1xf32>
    %38 = arith.addf %34, %37 : vector<1x32x1xf32>
    %c2_9 = arith.constant 2 : index
    %39 = memref.load %arg2[%c2_9] : memref<3xf32, #tpu.memory_space<smem>>
    %40 = vector.broadcast %39 : f32 to vector<1x32x1xf32>
    %41 = arith.mulf %40, %31 : vector<1x32x1xf32>
    %42 = arith.addf %38, %41 : vector<1x32x1xf32>
    %43 = arith.negf %42 : vector<1x32x1xf32>
    %44 = math.exp %43 : vector<1x32x1xf32>
    %cst_10 = arith.constant 1.000000e+00 : f32
    %45 = vector.broadcast %cst_10 : f32 to vector<1x32x1xf32>
    %46 = arith.addf %45, %44 : vector<1x32x1xf32>
    %47 = arith.divf %45, %46 : vector<1x32x1xf32>
    %48 = vector.broadcast %47 : vector<1x32x1xf32> to vector<1x32x256xf32>
    %49 = arith.mulf %0, %48 : vector<1x32x256xf32>
    %c0_11 = arith.constant 0 : index
    %c0_12 = arith.constant 0 : index
    %c0_13 = arith.constant 0 : index
    %50 = vector.load %arg4[%c0_11, %c0_12, %c0_13] : memref<1x32x256xf32, #tpu.memory_space<vmem>>, vector<1x32x256xf32>
    tpu.vector_store %arg4[%c0_11, %c0_12, %c0_13], %49 {strides = array<i32>} : memref<1x32x256xf32, #tpu.memory_space<vmem>>, vector<1x32x256xf32>,
    return
  }
  func.func @transform_0(%arg0: i32) -> i32 {
    %c0_i32 = arith.constant 0 : i32
    %c0_i32_0 = arith.constant 0 : i32
    return %c0_i32 : i32
  }
  func.func @transform_1(%arg0: i32) -> i32 {
    %c0_i32 = arith.constant 0 : i32
    %c0_i32_0 = arith.constant 0 : i32
    return %c0_i32 : i32
  }
  func.func @transform_2(%arg0: i32) -> (i32, i32, i32) {
    %c0_i32 = arith.constant 0 : i32
    %c0_i32_0 = arith.constant 0 : i32
    %c0_i32_1 = arith.constant 0 : i32
    return %arg0, %c0_i32, %c0_i32_0 : i32, i32, i32
  }
  func.func @transform_3(%arg0: i32) -> (i32, i32, i32) {
    %c0_i32 = arith.constant 0 : i32
    %c0_i32_0 = arith.constant 0 : i32
    %c0_i32_1 = arith.constant 0 : i32
    return %arg0, %c0_i32, %c0_i32_0 : i32, i32, i32
  }
}

</mosaic_0001>

<llo_original>
// kernel: tpu_custom_call.1
$region0: #{tpu_custom_call.1}
  #allocation0 [shape = 'u32[]', space=smem, size = 0x4, offset = 0x4, fixed_abs, tag = 'smem constant byte address 0x4 - core index']
  #allocation1 [shape = 'u32[144,128]{1,0:T(1,128)}', space=vmem, size = 0x12000, scoped, tag = 'internal scratch']
  %s0 = inlined_call_operand.hbm [shape: f32[3], index: 0, kind: input, shape index: {}]
  %s1 = inlined_call_operand.vmem [shape: f32[3], index: 1, kind: input, shape index: {}]
  %s2 = inlined_call_operand.hbm [shape: f32[2,32,256], index: 2, kind: input, shape index: {}]
  %s3 = inlined_call_operand.hbm [shape: f32[2,32,256], index: 3, kind: output, shape index: {}]
  %s4 = sld [smem:[#allocation0]]
  $region57: #{tpu_custom_call.1} parent=0
    _
  %s6 = ssub.s32 1, %s4
  %s7 = scalar_select 0, %s6, %s4
  $region1: #{tpu_custom_call.1} parent=0
    #allocation2 [shape = 'u8[512]{0}', space=smem, size = 0x200, scoped, tag = 'input window, operand 0, single buffered']
    #allocation3 [shape = 's32[2]{0}', space=sflag, size = 0x8, scoped, tag = 'scoped memory for tpu_custom_call.1']
    #allocation4 [shape = 's32[2]{0}', space=sflag, size = 0x8, scoped, tag = 'scoped memory for tpu_custom_call.1']
    #allocation5 [shape = 's32[2]{0}', space=sflag, size = 0x8, scoped, tag = 'scoped memory for tpu_custom_call.1']
    #allocation6 [shape = 's32[2]{0}', space=sflag, size = 0x8, scoped, tag = 'scoped memory for tpu_custom_call.1']
    #allocation7 [shape = 'u8[512]{0}', space=smem, size = 0x200, scoped, tag = 'input window, operand 1, single buffered']
    #allocation8 [shape = 'u8[65536]{0}', space=vmem, size = 0x10000, scoped, tag = 'input window, operand 2']
    #allocation9 [shape = 'u8[65536]{0}', space=vmem, size = 0x10000, scoped, tag = 'output window, operand 0']
    %8 = vsyncpa [#allocation5], 0
    %9 = vsyncpa [#allocation6], 0
    %10 = vsyncpa [#allocation3], 0
    %s11 = scalar_lea.sflag [#allocation3], 1
    %12 = vsyncpa %s11, 0
    %13 = vsyncpa [#allocation4], 0
    %s14 = scalar_lea.sflag [#allocation4], 1
    %15 = vsyncpa %s14, 0
    loop: start=0, step=1, limit=4
    $region2: #{tpu_custom_call.1} parent=1 // loop_pre_header
      _
    $region3: #{tpu_custom_call.1} parent=1 // loop_header
      %s17 = sphi 0, %s21
      %p18 = scmp.ge.s32.totalorder %s17, 4
      %s25 = sphi 0, %s25
      %s27 = sphi 0, %s25
      %s28 = sphi 0, %s27
      %s42 = sphi 0, %s28
      %s46 = sphi 0, %s46
      %s48 = sphi 0, %s46
      %s49 = sphi 0, %s48
      %s63 = sphi 0, %s49
      %s69 = sphi 0, %s71
      %s72 = sphi 0, %s69
      %s73 = sphi 0, %s72
      %s89 = sphi 0, %s73
      %s95 = sphi 0, %s97
      %s98 = sphi 0, %s95
      %s99 = sphi 0, %s98
      %s115 = sphi 0, %s99
    $region4: #{tpu_custom_call.1} parent=1 // loop_header_branch
      %20 = sbr.rel (%p18) target = $region8
    $region5: #{tpu_custom_call.1} parent=1 // loop_body
      %s22 = ssub.s32 %s17, 1
      %s23 = ssub.s32 %s17, 2
      %s24 = sadd.s32 %s17, 1
      %s26 = sadd.s32 %s25, 1
      %p29 = scmp.eq.s32.totalorder %s17, 1
      %p30 = scmp.ne.s32.totalorder %s25, %s27
      %p31 = scmp.eq.s32.totalorder %s17, 0
      %p32 = por %p30, %p31
      %p33 = scmp.ne.s32.totalorder %s25, %s27
      %p34 = scmp.eq.s32.totalorder %s22, 1
      %p35 = por %p33, %p34
      %p36 = scmp.ne.s32.totalorder %s27, %s28
      %p37 = scmp.eq.s32.totalorder %s22, 0
      %p38 = por %p36, %p37
      %p39 = scmp.ne.s32.totalorder %s27, %s28
      %p40 = scmp.eq.s32.totalorder %s23, 1
      %p41 = por %p39, %p40
      %p43 = scmp.ne.s32.totalorder %s28, %s42
      %p44 = scmp.eq.s32.totalorder %s23, 0
      %p45 = por %p43, %p44
      %s47 = sadd.s32 %s46, 1
      %p50 = scmp.eq.s32.totalorder %s17, 1
      %p51 = scmp.ne.s32.totalorder %s46, %s48
      %p52 = scmp.eq.s32.totalorder %s17, 0
      %p53 = por %p51, %p52
      %p54 = scmp.ne.s32.totalorder %s46, %s48
      %p55 = scmp.eq.s32.totalorder %s22, 1
      %p56 = por %p54, %p55
      %p57 = scmp.ne.s32.totalorder %s48, %s49
      %p58 = scmp.eq.s32.totalorder %s22, 0
      %p59 = por %p57, %p58
      %p60 = scmp.ne.s32.totalorder %s48, %s49
      %p61 = scmp.eq.s32.totalorder %s23, 1
      %p62 = por %p60, %p61
      %p64 = scmp.ne.s32.totalorder %s49, %s63
      %p65 = scmp.eq.s32.totalorder %s23, 0
      %p66 = por %p64, %p65
      %s67 = ssub.s32 %s17, %s24
      %p68 = scmp.eq.s32.totalorder %s67, 0
      %s70 = sadd.s32 %s69, 1
      %s71 = scalar_select %p68, %s69, %s70
      %p74 = pneg %p68
      %p75 = scmp.eq.s32.totalorder %s17, 1
      %p76 = por %p74, %p75
      %p77 = scmp.ne.s32.totalorder %s69, %s72
      %p78 = scmp.eq.s32.totalorder %s17, 0
      %p79 = por %p77, %p78
      %p80 = scmp.ne.s32.totalorder %s69, %s72
      %p81 = scmp.eq.s32.totalorder %s22, 1
      %p82 = por %p80, %p81
      %p83 = scmp.ne.s32.totalorder %s72, %s73
      %p84 = scmp.eq.s32.totalorder %s22, 0
      %p85 = por %p83, %p84
      %p86 = scmp.ne.s32.totalorder %s72, %s73
      %p87 = scmp.eq.s32.totalorder %s23, 1
      %p88 = por %p86, %p87
      %p90 = scmp.ne.s32.totalorder %s73, %s89
      %p91 = scmp.eq.s32.totalorder %s23, 0
      %p92 = por %p90, %p91
      %s93 = ssub.s32 %s17, %s24
      %p94 = scmp.eq.s32.totalorder %s93, 0
      %s96 = sadd.s32 %s95, 1
      %s97 = scalar_select %p94, %s95, %s96
      %p100 = pneg %p94
      %p101 = scmp.eq.s32.totalorder %s17, 1
      %p102 = por %p100, %p101
      %p103 = scmp.ne.s32.totalorder %s95, %s98
      %p104 = scmp.eq.s32.totalorder %s17, 0
      %p105 = por %p103, %p104
      %p106 = scmp.ne.s32.totalorder %s95, %s98
      %p107 = scmp.eq.s32.totalorder %s22, 1
      %p108 = por %p106, %p107
      %p109 = scmp.ne.s32.totalorder %s98, %s99
      %p110 = scmp.eq.s32.totalorder %s22, 0
      %p111 = por %p109, %p110
      %p112 = scmp.ne.s32.totalorder %s98, %s99
      %p113 = scmp.eq.s32.totalorder %s23, 1
      %p114 = por %p112, %p113
      %p116 = scmp.ne.s32.totalorder %s99, %s115
      %p117 = scmp.eq.s32.totalorder %s23, 0
      %p118 = por %p116, %p117
      %p119 = scmp.le.s32.totalorder 1, %s17
      %p120 = scmp.lt.s32.totalorder %s17, 3
      %p121 = pnand %p119, %p120
      %p122 = pneg %p121
      // Predicated region
      $region9: #{tpu_custom_call.1} parent=5 // pred_check
        _
      $region10: #{tpu_custom_call.1} parent=5 // pred_check_branch
        %124 = sbr.rel (%p121) target = $region12
      $region11: #{tpu_custom_call.1} parent=5 // pred_region
        %s125 = ssub.s32 %s17, 1
        // Predicated region
        $region13: #{tpu_custom_call.1} parent=11 // pred_check
          %p126 = pneg %p38
        $region14: #{tpu_custom_call.1} parent=11 // pred_check_branch
          %128 = sbr.rel (%p126) target = $region16
        $region15: #{tpu_custom_call.1} parent=11 // pred_region
          %s130 = ssub.s32 16, 16
          %131 = vsyncadd [#allocation5], %s130
          %134 = dma.hbm_to_smem %s0, 16, [#allocation2], [#allocation5]
        $region16: #{tpu_custom_call.1} parent=11 // pred_fallthru
          _
        // Predicated region
        $region17: #{tpu_custom_call.1} parent=11 // pred_check
          %p135 = pneg %p59
        $region18: #{tpu_custom_call.1} parent=11 // pred_check_branch
          %137 = sbr.rel (%p135) target = $region20
        $region19: #{tpu_custom_call.1} parent=11 // pred_region
          %s139 = ssub.s32 16, 16
          %140 = vsyncadd [#allocation6], %s139
          %s142 = sshll.u32 %s1, 4
          %s143 = int_to_ptr.vmem [resolvable:$true] %s142
          %145 = dma.vmem_to_smem %s143, 16, [#allocation7], [#allocation6]
        $region20: #{tpu_custom_call.1} parent=11 // pred_fallthru
          _
      $region12: #{tpu_custom_call.1} parent=5 // pred_fallthru
        _
      %p146 = scmp.lt.s32.totalorder %s17, 2
      // Predicated region
      $region21: #{tpu_custom_call.1} parent=5 // pred_check
        %p147 = pneg %p146
      $region22: #{tpu_custom_call.1} parent=5 // pred_check_branch
        %149 = sbr.rel (%p147) target = $region24
      $region23: #{tpu_custom_call.1} parent=5 // pred_region
        // Predicated region
        $region25: #{tpu_custom_call.1} parent=23 // pred_check
          %p150 = pneg %p79
        $region26: #{tpu_custom_call.1} parent=23 // pred_check_branch
          %152 = sbr.rel (%p150) target = $region28
        $region27: #{tpu_custom_call.1} parent=23 // pred_region
          %s153 = sand.u32 %s69, 1
          %s154 = scalar_lea.sflag [#allocation3], %s153
          %s155 = sand.u32 %s69, 1
          %s156 = smul.addr %s155, 64
          %s157 = scalar_lea.vmem [#allocation8], %s156
          %s159 = ssub.s32 1024, 1024
          %160 = vsyncadd %s154, %s159
          %s161 = smul.addr %s17, 8
          %s162 = smul.addr %s161, 128
          %s163 = scalar_lea.hbm %s2, %s162
          %s164 = sshll.u32 %s157, 4
          %s165 = int_to_ptr.vmem [resolvable:$true] %s164
          %170 = dma.hbm_to_vmem [thread:$0]  %s163, 1024, %s165, %s154, 256, 256, 16
        $region28: #{tpu_custom_call.1} parent=23 // pred_fallthru
          _
      $region24: #{tpu_custom_call.1} parent=5 // pred_fallthru
        _
      %p171 = scmp.le.s32.totalorder 1, %s17
      %p172 = scmp.lt.s32.totalorder %s17, 3
      %p173 = pnand %p171, %p172
      %p174 = pneg %p173
      // Predicated region
      $region29: #{tpu_custom_call.1} parent=5 // pred_check
        _
      $region30: #{tpu_custom_call.1} parent=5 // pred_check_branch
        %176 = sbr.rel (%p173) target = $region32
      $region31: #{tpu_custom_call.1} parent=5 // pred_region
        %s177 = ssub.s32 %s17, 1
        // Predicated region
        $region33: #{tpu_custom_call.1} parent=31 // pred_check
          %p178 = pneg %p38
        $region34: #{tpu_custom_call.1} parent=31 // pred_check_branch
          %180 = sbr.rel (%p178) target = $region36
        $region35: #{tpu_custom_call.1} parent=31 // pred_region
          %181 = dma.done [#allocation5], 16
        $region36: #{tpu_custom_call.1} parent=31 // pred_fallthru
          _
        // Predicated region
        $region37: #{tpu_custom_call.1} parent=31 // pred_check
          %p182 = pneg %p59
        $region38: #{tpu_custom_call.1} parent=31 // pred_check_branch
          %184 = sbr.rel (%p182) target = $region40
        $region39: #{tpu_custom_call.1} parent=31 // pred_region
          %185 = dma.done [#allocation6], 16
        $region40: #{tpu_custom_call.1} parent=31 // pred_fallthru
          _
        %s186 = sand.u32 %s72, 1
        %s187 = scalar_lea.sflag [#allocation3], %s186
        %s188 = sand.u32 %s72, 1
        %s189 = smul.addr %s188, 64
        %s190 = scalar_lea.vmem [#allocation8], %s189
        // Predicated region
        $region41: #{tpu_custom_call.1} parent=31 // pred_check
          %p191 = pneg %p85
        $region42: #{tpu_custom_call.1} parent=31 // pred_check_branch
          %193 = sbr.rel (%p191) target = $region44
        $region43: #{tpu_custom_call.1} parent=31 // pred_region
          %194 = dma.done %s187, 1024
        $region44: #{tpu_custom_call.1} parent=31 // pred_fallthru
          _
        %195 = sfence
        %p196 = pneg %p38
        %p197 = pneg %p35
        %p198 = pneg %p59
        %p199 = pneg %p56
        %s200 = sand.u32 %s72, 1
        %s201 = scalar_lea.sflag [#allocation3], %s200
        %s202 = sand.u32 %s72, 1
        %s203 = smul.addr %s202, 64
        %s204 = scalar_lea.vmem [#allocation8], %s203
        %p205 = pneg %p85
        %p206 = pneg %p82
        %p207 = pneg %p111
        %p208 = pneg %p108
        %s209 = sand.u32 %s98, 1
        %s210 = scalar_lea.sflag [#allocation4], %s209
        %s211 = sand.u32 %s98, 1
        %s212 = smul.addr %s211, 64
        %s213 = scalar_lea.vmem [#allocation9], %s212
        %v214 = vld [vmem:[%s190] sm:$0xff]
        %v215 = vld [vmem:[%s190 + $0x8] sm:$0xff]
        %v216 = vld [vmem:[%s190 + $0x10] sm:$0xff]
        %v217 = vld [vmem:[%s190 + $0x18] sm:$0xff]
        %v218 = vld [vmem:[%s190 + $0x20] sm:$0xff]
        %v219 = vld [vmem:[%s190 + $0x28] sm:$0xff]
        %v220 = vld [vmem:[%s190 + $0x30] sm:$0xff]
        %v221 = vld [vmem:[%s190 + $0x38] sm:$0xff]
        %v222 = vadd.f32 %v214, %v215
        %223 = vadd.xlane.f32.xlu0 %v222
        %v224 = vpop.xlane.xlu0 %223
        %v225 = vadd.f32 %v216, %v217
        %226 = vadd.xlane.f32.xlu0 %v225
        %v227 = vpop.xlane.xlu0 %226
        %v228 = vadd.f32 %v218, %v219
        %229 = vadd.xlane.f32.xlu0 %v228
        %v230 = vpop.xlane.xlu0 %229
        %v231 = vadd.f32 %v220, %v221
        %232 = vadd.xlane.f32.xlu0 %v231
        %v233 = vpop.xlane.xlu0 %232
        %v234 = vmul.f32 %v224, 0.00390625
        %v235 = vmul.f32 %v227, 0.00390625
        %v236 = vmul.f32 %v230, 0.00390625
        %v237 = vmul.f32 %v233, 0.00390625
        %vm242 = vcmask 1040384
        %v243 = vrot.slane %v234, 7
        %v244 = vrot.slane %v235, 7
        %v245 = vsel %vm242, %v243, %v244
        %v246 = vrot.slane %v236, 7
        %v247 = vsel %vm242, %v244, %v246
        %v248 = vrot.slane %v237, 7
        %v249 = vsel %vm242, %v246, %v248
        %v254 = vsel %vm242, 0.0, %v243
        %vm255 = vcmask 1046528
        %v256 = vrot.slane %v234, 1
        %v257 = vrot.slane %v235, 1
        %v258 = vsel %vm255, %v256, %v257
        %v259 = vrot.slane %v236, 1
        %v260 = vsel %vm255, %v257, %v259
        %v261 = vrot.slane %v237, 1
        %v262 = vsel %vm255, %v259, %v261
        %v267 = vsel %vm255, %v261, 0.0
        %s268 = sld [smem:[#allocation2]]
        %v269 = vstv %s268
        %v270 = vmul.f32 %v269, %v254
        %v271 = vmul.f32 %v269, %v245
        %v272 = vmul.f32 %v269, %v247
        %v273 = vmul.f32 %v269, %v249
        %s274 = sld [smem:[#allocation2 + $0x1]]
        %v275 = vstv %s274
        %v276 = vmul.f32 %v275, %v234
        %v277 = vmul.f32 %v275, %v235
        %v278 = vmul.f32 %v275, %v236
        %v279 = vmul.f32 %v275, %v237
        %v280 = vadd.f32 %v270, %v276
        %v281 = vadd.f32 %v271, %v277
        %v282 = vadd.f32 %v272, %v278
        %v283 = vadd.f32 %v273, %v279
        %s284 = sld [smem:[#allocation2 + $0x2]]
        %v285 = vstv %s284
        %v286 = vmul.f32 %v285, %v258
        %v287 = vmul.f32 %v285, %v260
        %v288 = vmul.f32 %v285, %v262
        %v289 = vmul.f32 %v285, %v267
        %v290 = vadd.f32 %v280, %v286
        %v291 = vadd.f32 %v281, %v287
        %v292 = vadd.f32 %v282, %v288
        %v293 = vadd.f32 %v283, %v289
        %v294 = vxor.u32 %v290, 2147483648
        %v295 = vxor.u32 %v291, 2147483648
        %v296 = vxor.u32 %v292, 2147483648
        %v297 = vxor.u32 %v293, 2147483648
        %v298 = vmul.f32 %v294, 1.442695
        %v299 = vpow.pop %v298
        %v300 = vmul.f32 %v295, 1.442695
        %v301 = vpow.pop %v300
        %v302 = vmul.f32 %v296, 1.442695
        %v303 = vpow.pop %v302
        %v304 = vmul.f32 %v297, 1.442695
        %v305 = vpow.pop %v304
        %v306 = vadd.f32 %v299, 1.0
        %v307 = vadd.f32 %v301, 1.0
        %v308 = vadd.f32 %v303, 1.0
        %v309 = vadd.f32 %v305, 1.0
        %v310 = vrcp.pop %v306
        %v311 = vmul.f32 1.0, %v310
        %v312 = vrcp.pop %v307
        %v313 = vmul.f32 1.0, %v312
        %v314 = vrcp.pop %v308
        %v315 = vmul.f32 1.0, %v314
        %v316 = vrcp.pop %v309
        %v317 = vmul.f32 1.0, %v316
        %v318 = vmul.f32 %v290, %v311
        %v319 = vmul.f32 %v291, %v313
        %v320 = vmul.f32 %v292, %v315
        %v321 = vmul.f32 %v293, %v317
        %vm326 = vcmask 1041408
        %v327 = vrot.slane %v318, 6
        %v328 = vrot.slane %v319, 6
        %v329 = vsel %vm326, %v327, %v328
        %v330 = vrot.slane %v320, 6
        %v331 = vsel %vm326, %v328, %v330
        %v332 = vrot.slane %v321, 6
        %v333 = vsel %vm326, %v330, %v332
        %v338 = vsel %vm326, 0.0, %v327
        %vm339 = vcmask 1045504
        %v340 = vrot.slane %v318, 2
        %v341 = vrot.slane %v319, 2
        %v342 = vsel %vm339, %v340, %v341
        %v343 = vrot.slane %v320, 2
        %v344 = vsel %vm339, %v341, %v343
        %v345 = vrot.slane %v321, 2
        %v346 = vsel %vm339, %v343, %v345
        %v351 = vsel %vm339, %v345, 0.0
        %s352 = sld [smem:[#allocation7]]
        %v353 = vstv %s352
        %v354 = vmul.f32 %v353, %v338
        %v355 = vmul.f32 %v353, %v329
        %v356 = vmul.f32 %v353, %v331
        %v357 = vmul.f32 %v353, %v333
        %s358 = sld [smem:[#allocation7 + $0x1]]
        %v359 = vstv %s358
        %v360 = vmul.f32 %v359, %v318
        %v361 = vmul.f32 %v359, %v319
        %v362 = vmul.f32 %v359, %v320
        %v363 = vmul.f32 %v359, %v321
        %v364 = vadd.f32 %v354, %v360
        %v365 = vadd.f32 %v355, %v361
        %v366 = vadd.f32 %v356, %v362
        %v367 = vadd.f32 %v357, %v363
        %s368 = sld [smem:[#allocation7 + $0x2]]
        %v369 = vstv %s368
        %v370 = vmul.f32 %v369, %v342
        %v371 = vmul.f32 %v369, %v344
        %v372 = vmul.f32 %v369, %v346
        %v373 = vmul.f32 %v369, %v351
        %v374 = vadd.f32 %v364, %v370
        %v375 = vadd.f32 %v365, %v371
        %v376 = vadd.f32 %v366, %v372
        %v377 = vadd.f32 %v367, %v373
        %v378 = vxor.u32 %v374, 2147483648
        %v379 = vxor.u32 %v375, 2147483648
        %v380 = vxor.u32 %v376, 2147483648
        %v381 = vxor.u32 %v377, 2147483648
        %v382 = vmul.f32 %v378, 1.442695
        %v383 = vpow.pop %v382
        %v384 = vmul.f32 %v379, 1.442695
        %v385 = vpow.pop %v384
        %v386 = vmul.f32 %v380, 1.442695
        %v387 = vpow.pop %v386
        %v388 = vmul.f32 %v381, 1.442695
        %v389 = vpow.pop %v388
        %v390 = vadd.f32 %v383, 1.0
        %v391 = vadd.f32 %v385, 1.0
        %v392 = vadd.f32 %v387, 1.0
        %v393 = vadd.f32 %v389, 1.0
        %v394 = vrcp.pop %v390
        %v395 = vmul.f32 1.0, %v394
        %v396 = vrcp.pop %v391
        %v397 = vmul.f32 1.0, %v396
        %v398 = vrcp.pop %v392
        %v399 = vmul.f32 1.0, %v398
        %v400 = vrcp.pop %v393
        %v401 = vmul.f32 1.0, %v400
        %403 = vset.pattern.permute.xlu0 0
        %404 = vperm.xlu0 %403, %v395
        %v405 = vpop.permute.xlu0 %404
        %408 = vset.pattern.permute.xlu0 0
        %409 = vperm.xlu0 %408, %v397
        %v410 = vpop.permute.xlu0 %409
        %413 = vset.pattern.permute.xlu0 0
        %414 = vperm.xlu0 %413, %v399
        %v415 = vpop.permute.xlu0 %414
        %418 = vset.pattern.permute.xlu0 0
        %419 = vperm.xlu0 %418, %v401
        %v420 = vpop.permute.xlu0 %419
        %v422 = vmul.f32 %v214, %v405
        %v423 = vmul.f32 %v215, %v405
        %v424 = vmul.f32 %v216, %v410
        %v425 = vmul.f32 %v217, %v410
        %v426 = vmul.f32 %v218, %v415
        %v427 = vmul.f32 %v219, %v415
        %v428 = vmul.f32 %v220, %v420
        %v429 = vmul.f32 %v221, %v420
        %430 = vst [vmem:[%s213] sm:$0xff] %v422
        %431 = vst [vmem:[%s213 + $0x8] sm:$0xff] %v423
        %432 = vst [vmem:[%s213 + $0x10] sm:$0xff] %v424
        %433 = vst [vmem:[%s213 + $0x18] sm:$0xff] %v425
        %434 = vst [vmem:[%s213 + $0x20] sm:$0xff] %v426
        %435 = vst [vmem:[%s213 + $0x28] sm:$0xff] %v427
        %436 = vst [vmem:[%s213 + $0x30] sm:$0xff] %v428
        %437 = vst [vmem:[%s213 + $0x38] sm:$0xff] %v429
        %s438 = sand.u32 %s98, 1
        %s439 = scalar_lea.sflag [#allocation4], %s438
        %s440 = sand.u32 %s98, 1
        %s441 = smul.addr %s440, 64
        %s442 = scalar_lea.vmem [#allocation9], %s441
        // Predicated region
        $region45: #{tpu_custom_call.1} parent=31 // pred_check
          %p443 = pneg %p108
        $region46: #{tpu_custom_call.1} parent=31 // pred_check_branch
          %445 = sbr.rel (%p443) target = $region48
        $region47: #{tpu_custom_call.1} parent=31 // pred_region
          %s447 = ssub.s32 1024, 1024
          %448 = vsyncadd %s439, %s447
          %s449 = smul.addr %s22, 8
          %s450 = smul.addr %s449, 128
          %s451 = scalar_lea.hbm %s3, %s450
          %s452 = sshll.u32 %s442, 4
          %s453 = int_to_ptr.vmem [resolvable:$true] %s452
          %458 = dma.vmem_to_hbm [thread:$0]  %s453, 1024, %s451, %s439, 256, 256, 16
        $region48: #{tpu_custom_call.1} parent=31 // pred_fallthru
          _
      $region32: #{tpu_custom_call.1} parent=5 // pred_fallthru
        _
      %p459 = scmp.le.s32.totalorder 2, %s17
      // Predicated region
      $region49: #{tpu_custom_call.1} parent=5 // pred_check
        %p460 = pneg %p459
      $region50: #{tpu_custom_call.1} parent=5 // pred_check_branch
        %462 = sbr.rel (%p460) target = $region52
      $region51: #{tpu_custom_call.1} parent=5 // pred_region
        %s463 = ssub.s32 %s17, 2
        // Predicated region
        $region53: #{tpu_custom_call.1} parent=51 // pred_check
          %p464 = pneg %p114
        $region54: #{tpu_custom_call.1} parent=51 // pred_check_branch
          %466 = sbr.rel (%p464) target = $region56
        $region55: #{tpu_custom_call.1} parent=51 // pred_region
          %s467 = sand.u32 %s99, 1
          %s468 = scalar_lea.sflag [#allocation4], %s467
          %s469 = sand.u32 %s99, 1
          %s470 = smul.addr %s469, 64
          %s471 = scalar_lea.vmem [#allocation9], %s470
          %472 = dma.done %s468, 1024
        $region56: #{tpu_custom_call.1} parent=51 // pred_fallthru
          _
      $region52: #{tpu_custom_call.1} parent=5 // pred_fallthru
        _
    $region6: #{tpu_custom_call.1} parent=1 // loop_footer
      %s21 = sadd.s32 1, %s17
    $region7: #{tpu_custom_call.1} parent=1 // loop_footer_branch
      %16 = sbr.rel target = $region3
    $region8: #{tpu_custom_call.1} parent=1 // loop_exit
      _
    %473 = vsyncpa [#allocation3], 1
    %s474 = scalar_lea.sflag [#allocation3], 1
    %475 = vsyncpa %s474, 1
    %476 = vsyncpa [#allocation4], 1
    %s477 = scalar_lea.sflag [#allocation4], 1
    %478 = vsyncpa %s477, 1
    %479 = vsyncpa [#allocation5], 1
    %s480 = scalar_lea.sflag [#allocation5], 1
    %481 = vsyncpa %s480, 1
    %482 = vsyncpa [#allocation6], 1
    %s483 = scalar_lea.sflag [#allocation6], 1
    %484 = vsyncpa %s483, 1

</llo_original>
